<compile_context>
chip_gen: v7x
topology: tpu7x:2x2x1
jax: 0.10.0
libtpu: 0.0.40
codegen_flags: <defaults>
</compile_context>

<pallas_src>
import functools

import jax
import jax.numpy as jnp
from jax.experimental import pallas as pl
from jax.experimental.pallas import tpu as pltpu

GAMMA = 2.0
ALPHA = 0.25
LANES = 128
BLOCK_ROWS = 8192           # rows of 128 lanes per grid step (4 MiB f32 / input tile)
CHUNK_ROWS = 512            # inner-loop chunk (bounds live VMEM temporaries)
VMEM_LIMIT_BYTES = 32 * 1024 * 1024


def _tensorcores_per_chip():
    """Best-effort TensorCore count per chip (2 on v7x, else 1). Safe default 1."""
    try:
        info = pltpu.get_tpu_info()
    except Exception:
        return 1
    for attr in ("num_cores", "core_count", "num_tensorcores", "tensorcore_count"):
        n = getattr(info, attr, None)
        if isinstance(n, int) and n >= 1:
            return n
    return 1


def _focal_loss_kernel(pred_ref, label_ref, out_ref, *, gamma, alpha,
                       block_rows, chunk_rows, steps_per_shard, valid_rows,
                       first_partial_block, needs_mask):
    c = pl.program_id(0)
    j = pl.program_id(1)

    @pl.when(j == 0)
    def _():
        out_ref[...] = jnp.zeros_like(out_ref)

    block_idx = c * steps_per_shard + j
    num_chunks = block_rows // chunk_rows

    def chunk_loss(x, y):
        x = x.astype(jnp.float32)
        y = y.astype(jnp.float32)
        # Shared exponential: e = exp(-|x|) drives both BCE and sigmoid.
        e = jnp.exp(-jnp.abs(x))
        # BCEWithLogitsLoss(reduction='none'), numerically stable form:
        #   max(x, 0) - x*y + log1p(exp(-|x|))
        bce = jnp.maximum(x, 0.0) - x * y + jnp.log1p(e)
        # sigmoid(x) from the same exponential; approx EUP reciprocal, sign
        # select folded before the multiply.
        inv = pl.reciprocal(1.0 + e, approx=True)
        p = jnp.where(x >= 0.0, 1.0, e) * inv
        p_t = y * p + (1.0 - y) * (1.0 - p)
        alpha_factor = y * alpha + (1.0 - y) * (1.0 - alpha)
        t = 1.0 - p_t
        if gamma == 2.0:        # specialize default gamma: pure VPU multiply
            modulating = t * t
        else:
            modulating = t ** gamma
        return bce * alpha_factor * modulating

    def accumulate(vals):
        # VPU-only partial reduction into the resident (8, 128) output block.
        out_ref[...] += vals.reshape(chunk_rows // 8, 8, LANES).sum(axis=0)

    def body(ci):
        r0 = ci * chunk_rows
        if not isinstance(ci, int):
            r0 = pl.multiple_of(r0, chunk_rows)
        loss = chunk_loss(pred_ref[pl.ds(r0, chunk_rows), :],
                          label_ref[pl.ds(r0, chunk_rows), :])
        if needs_mask:
            # Only edge / phantom blocks pay for the mask; interior blocks
            # take the unmasked accumulate.
            is_edge = block_idx >= first_partial_block

            @pl.when(is_edge)
            def _():
                local = jax.lax.broadcasted_iota(jnp.int32, (chunk_rows, LANES), 0)
                grow = block_idx * block_rows + r0 + local   # global ROW index
                # NOTE: keep this as a true select (NaN/Inf garbage in padded
                # rows must not leak into the accumulator).
                accumulate(jnp.where(grow < valid_rows, loss, 0.0))

            @pl.when(jnp.logical_not(is_edge))
            def _():
                accumulate(loss)
        else:
            accumulate(loss)

    if num_chunks == 1:
        body(0)
    else:
        @pl.loop(0, num_chunks)
        def _(ci):
            body(ci)


def _focal_loss_elements(pred, label, gamma, alpha):
    """Plain jnp elementwise focal loss (reference + tiny-tail + 'none' path)."""
    x = pred.astype(jnp.float32)
    y = label.astype(jnp.float32)
    bce = jnp.maximum(x, 0.0) - x * y + jnp.log1p(jnp.exp(-jnp.abs(x)))
    p = jax.nn.sigmoid(x)
    p_t = y * p + (1.0 - y) * (1.0 - p)
    af = y * alpha + (1.0 - y) * (1.0 - alpha)
    mf = (1.0 - p_t) ** gamma
    return bce * af * mf


def focal_loss(pred, label, *, gamma=GAMMA, alpha=ALPHA, reduction="mean"):
    """Focal loss matching the PyTorch FocalLoss.forward semantics."""
    assert pred.shape == label.shape
    if reduction == "none":
        # TODO(synk): 'none' returns the full elementwise map; it is computed in
        # plain jnp rather than fused into the Pallas reduction kernel.
        return _focal_loss_elements(pred, label, gamma, alpha)
    if reduction not in ("mean", "sum"):
        raise ValueError(f"unknown reduction: {reduction!r}")

    n_elems = pred.size
    pred_flat = pred.reshape(-1)
    label_flat = label.reshape(-1)

    main = (n_elems // LANES) * LANES    # lane-aligned prefix handled by kernel
    rows = main // LANES
    total = jnp.float32(0.0)

    if rows > 0:
        if rows >= CHUNK_ROWS:
            chunk_rows = CHUNK_ROWS
            block_rows = min(BLOCK_ROWS, pl.cdiv(rows, CHUNK_ROWS) * CHUNK_ROWS)
        else:
            block_rows = pl.cdiv(rows, 8) * 8
            chunk_rows = block_rows

        total_blocks = pl.cdiv(rows, block_rows)
        num_cores = _tensorcores_per_chip()
        num_shards = num_cores if (num_cores > 1 and total_blocks >= num_cores) else 1
        steps = pl.cdiv(total_blocks, num_shards)
        needs_mask = (num_shards * steps * block_rows) != rows
        first_partial_block = rows // block_rows

        sliced = main != n_elems
        if sliced:
            pred2d = pred_flat[:main].reshape(rows, LANES)
            label2d = label_flat[:main].reshape(rows, LANES)
        else:
            pred2d = pred_flat.reshape(rows, LANES)      # free bitcast
            label2d = label_flat.reshape(rows, LANES)

        def in_index_map(c, j):
            # Clamp phantom (past-the-end) blocks to a valid block; their
            # contribution is zeroed by the in-kernel row mask.
            return (jnp.minimum(c * steps + j, total_blocks - 1), 0)

        in_spec = pl.BlockSpec((block_rows, LANES), in_index_map)

        if num_shards > 1:
            dim_sem = (pltpu.CORE_PARALLEL, pltpu.ARBITRARY)
        else:
            dim_sem = ("arbitrary", "arbitrary")

        compiler_params = pltpu.CompilerParams(
            dimension_semantics=dim_sem,
            vmem_limit_bytes=VMEM_LIMIT_BYTES,
            # Let the ragged-path slice+reshape fuse into the pallas_call
            # instead of materializing a near-full HBM copy of the inputs.
            allow_input_fusion=[True, True] if sliced else None,
        )

        partials = pl.pallas_call(
            functools.partial(
                _focal_loss_kernel, gamma=gamma, alpha=alpha,
                block_rows=block_rows, chunk_rows=chunk_rows,
                steps_per_shard=steps, valid_rows=rows,
                first_partial_block=first_partial_block,
                needs_mask=needs_mask),
            out_shape=jax.ShapeDtypeStruct((num_shards * 8, LANES), jnp.float32),
            grid_spec=pltpu.PrefetchScalarGridSpec(
                num_scalar_prefetch=0,
                grid=(num_shards, steps),
                in_specs=[in_spec, in_spec],
                out_specs=pl.BlockSpec((8, LANES), lambda c, j: (c, 0)),
            ),
            compiler_params=compiler_params,
        )(pred2d, label2d)
        total = jnp.sum(partials)

    if main < n_elems:
        # Sub-128-element tail: negligible, handled in plain jnp.
        total = total + jnp.sum(
            _focal_loss_elements(pred_flat[main:], label_flat[main:],
                                 gamma, alpha))

    if reduction == "mean":
        return total / jnp.float32(n_elems)
    return total


if __name__ == "__main__":
    key = jax.random.PRNGKey(0)
    k1, k2, k3, k4 = jax.random.split(key, 4)

    # Tolerances are relaxed vs exact f32 because the sigmoid uses the EUP's
    # approximate reciprocal (pl.reciprocal(approx=True)).
    RTOL, ATOL = 5e-3, 1e-4

    # NCHW-like logits (batch=2, channels=4, spatial=16x16): lane-aligned path.
    pred = jax.random.normal(k1, (2, 4, 16, 16), dtype=jnp.float32)
    label = (jax.random.uniform(k2, (2, 4, 16, 16)) > 0.5).astype(jnp.float32)
    out = jax.block_until_ready(focal_loss(pred, label, reduction="mean"))
    ref = jnp.mean(_focal_loss_elements(pred, label, GAMMA, ALPHA))
    assert jnp.allclose(out, ref, rtol=RTOL, atol=ATOL), (out, ref)

    # Odd-sized input: exercises ragged-block masking + jnp tail path.
    pred2 = jax.random.normal(k3, (2, 3, 17, 19), dtype=jnp.float32)
    label2 = (jax.random.uniform(k4, (2, 3, 17, 19)) > 0.5).astype(jnp.float32)
    out2 = jax.block_until_ready(focal_loss(pred2, label2, reduction="sum"))
    ref2 = jnp.sum(_focal_loss_elements(pred2, label2, GAMMA, ALPHA))
    assert jnp.allclose(out2, ref2, rtol=RTOL, atol=ATOL), (out2, ref2)

    # bf16 labels streamed directly (no wrapper cast; kernel upcasts in VMEM).
    label3 = (jax.random.uniform(k2, (2, 4, 16, 16)) > 0.5).astype(jnp.bfloat16)
    out3 = jax.block_until_ready(focal_loss(pred, label3, reduction="mean"))
    ref3 = jnp.mean(_focal_loss_elements(pred, label3, GAMMA, ALPHA))
    assert jnp.allclose(out3, ref3, rtol=RTOL, atol=ATOL), (out3, ref3)

    print("KERNEL_OK")
</pallas_src>

<mosaic_0001>
module attributes {stable_mosaic.version = 11 : i64} {
  func.func @_focal_loss_kernel(%arg0: i32, %arg1: i32, %arg2: memref<16x128xf32, #tpu.memory_space<vmem>>, %arg3: memref<16x128xf32, #tpu.memory_space<vmem>>, %arg4: memref<8x128xf32, #tpu.memory_space<vmem>>) attributes {dimension_semantics = [#tpu.dimension_semantics<arbitrary>, #tpu.dimension_semantics<arbitrary>], iteration_bounds = array<i64: 1, 1>, scalar_prefetch = 0 : i64, scratch_operands = 0 : i64, tpu.core_type = #tpu.core_type<tc>, window_params = [{transform_indices = @transform_0, window_bounds = array<i64: 16, 128>}, {transform_indices = @transform_1, window_bounds = array<i64: 16, 128>}, {transform_indices = @transform_2, window_bounds = array<i64: 8, 128>}]} {
    %c0_i32 = arith.constant 0 : i32
    %0 = arith.cmpi eq, %arg1, %c0_i32 : i32
    %1 = arith.extui %0 : i1 to i32
    %c0_i32_0 = arith.constant 0 : i32
    %2 = arith.cmpi ne, %1, %c0_i32_0 : i32
    scf.if %2 {
      %cst_19 = arith.constant 0.000000e+00 : f32
      %47 = vector.broadcast %cst_19 : f32 to vector<8x128xf32>
      %c0_20 = arith.constant 0 : index
      %c0_21 = arith.constant 0 : index
      %48 = vector.load %arg4[%c0_20, %c0_21] : memref<8x128xf32, #tpu.memory_space<vmem>>, vector<8x128xf32>
      tpu.vector_store %arg4[%c0_20, %c0_21], %47 {strides = array<i32>} : memref<8x128xf32, #tpu.memory_space<vmem>>, vector<8x128xf32>,
    } else {
    }
    %c0 = arith.constant 0 : index
    %c0_1 = arith.constant 0 : index
    %3 = vector.load %arg2[%c0, %c0_1] : memref<16x128xf32, #tpu.memory_space<vmem>>, vector<16x128xf32>
    %c0_2 = arith.constant 0 : index
    %c0_3 = arith.constant 0 : index
    %4 = vector.load %arg3[%c0_2, %c0_3] : memref<16x128xf32, #tpu.memory_space<vmem>>, vector<16x128xf32>
    %5 = math.absf %3 : vector<16x128xf32>
    %cst = arith.constant 0.000000e+00 : f32
    %6 = vector.broadcast %cst : f32 to vector<16x128xf32>
    %7 = arith.subf %6, %5 : vector<16x128xf32>
    %8 = math.exp %7 : vector<16x128xf32>
    %cst_4 = arith.constant 0.000000e+00 : f32
    %9 = vector.broadcast %cst_4 : f32 to vector<16x128xf32>
    %10 = arith.maximumf %3, %9 : vector<16x128xf32>
    %11 = arith.mulf %3, %4 : vector<16x128xf32>
    %12 = arith.subf %10, %11 : vector<16x128xf32>
    %13 = math.log1p %8 : vector<16x128xf32>
    %14 = arith.addf %12, %13 : vector<16x128xf32>
    %cst_5 = arith.constant 1.000000e+00 : f32
    %15 = vector.broadcast %cst_5 : f32 to vector<16x128xf32>
    %16 = arith.addf %15, %8 : vector<16x128xf32>
    %17 = tpu.reciprocal %16 {approx = true} : vector<16x128xf32> -> vector<16x128xf32>
    %cst_6 = arith.constant 0.000000e+00 : f32
    %18 = vector.broadcast %cst_6 : f32 to vector<16x128xf32>
    %19 = arith.cmpf oge, %3, %18 : vector<16x128xf32>
    %cst_7 = arith.constant 1.000000e+00 : f32
    %20 = vector.broadcast %cst_7 : f32 to vector<16x128xf32>
    %21 = arith.select %19, %20, %8 : vector<16x128xi1>, vector<16x128xf32>
    %22 = arith.mulf %21, %17 : vector<16x128xf32>
    %23 = arith.mulf %4, %22 : vector<16x128xf32>
    %cst_8 = arith.constant 1.000000e+00 : f32
    %24 = vector.broadcast %cst_8 : f32 to vector<16x128xf32>
    %25 = arith.subf %24, %4 : vector<16x128xf32>
    %cst_9 = arith.constant 1.000000e+00 : f32
    %26 = vector.broadcast %cst_9 : f32 to vector<16x128xf32>
    %27 = arith.subf %26, %22 : vector<16x128xf32>
    %28 = arith.mulf %25, %27 : vector<16x128xf32>
    %29 = arith.addf %23, %28 : vector<16x128xf32>
    %cst_10 = arith.constant 2.500000e-01 : f32
    %30 = vector.broadcast %cst_10 : f32 to vector<16x128xf32>
    %31 = arith.mulf %4, %30 : vector<16x128xf32>
    %cst_11 = arith.constant 1.000000e+00 : f32
    %32 = vector.broadcast %cst_11 : f32 to vector<16x128xf32>
    %33 = arith.subf %32, %4 : vector<16x128xf32>
    %cst_12 = arith.constant 7.500000e-01 : f32
    %34 = vector.broadcast %cst_12 : f32 to vector<16x128xf32>
    %35 = arith.mulf %33, %34 : vector<16x128xf32>
    %36 = arith.addf %31, %35 : vector<16x128xf32>
    %cst_13 = arith.constant 1.000000e+00 : f32
    %37 = vector.broadcast %cst_13 : f32 to vector<16x128xf32>
    %38 = arith.subf %37, %29 : vector<16x128xf32>
    %39 = arith.mulf %38, %38 : vector<16x128xf32>
    %40 = arith.mulf %14, %36 : vector<16x128xf32>
    %41 = arith.mulf %40, %39 : vector<16x128xf32>
    %c0_14 = arith.constant 0 : index
    %c0_15 = arith.constant 0 : index
    %42 = vector.load %arg4[%c0_14, %c0_15] : memref<8x128xf32, #tpu.memory_space<vmem>>, vector<8x128xf32>
    %43 = vector.shape_cast %41 : vector<16x128xf32> to vector<2x8x128xf32>
    %cst_16 = arith.constant dense<0.000000e+00> : vector<8x128xf32>
    %44 = vector.multi_reduction <add>, %43, %cst_16 [0] : vector<2x8x128xf32> to vector<8x128xf32>
    %45 = arith.addf %42, %44 : vector<8x128xf32>
    %c0_17 = arith.constant 0 : index
    %c0_18 = arith.constant 0 : index
    %46 = vector.load %arg4[%c0_17, %c0_18] : memref<8x128xf32, #tpu.memory_space<vmem>>, vector<8x128xf32>
    tpu.vector_store %arg4[%c0_17, %c0_18], %45 {strides = array<i32>} : memref<8x128xf32, #tpu.memory_space<vmem>>, vector<8x128xf32>,
    return
  }
  func.func @transform_0(%arg0: i32, %arg1: i32) -> (i32, i32) {
    %c1_i32 = arith.constant 1 : i32
    %0 = arith.muli %arg0, %c1_i32 : i32
    %1 = arith.addi %0, %arg1 : i32
    %c0_i32 = arith.constant 0 : i32
    %2 = arith.minsi %1, %c0_i32 : i32
    %c0_i32_0 = arith.constant 0 : i32
    %c0_i32_1 = arith.constant 0 : i32
    return %2, %c0_i32_0 : i32, i32
  }
  func.func @transform_1(%arg0: i32, %arg1: i32) -> (i32, i32) {
    %c1_i32 = arith.constant 1 : i32
    %0 = arith.muli %arg0, %c1_i32 : i32
    %1 = arith.addi %0, %arg1 : i32
    %c0_i32 = arith.constant 0 : i32
    %2 = arith.minsi %1, %c0_i32 : i32
    %c0_i32_0 = arith.constant 0 : i32
    %c0_i32_1 = arith.constant 0 : i32
    return %2, %c0_i32_0 : i32, i32
  }
  func.func @transform_2(%arg0: i32, %arg1: i32) -> (i32, i32) {
    %c0_i32 = arith.constant 0 : i32
    %c0_i32_0 = arith.constant 0 : i32
    return %arg0, %c0_i32 : i32, i32
  }
}

</mosaic_0001>

<llo_original>
// kernel: tpu_custom_call.1
$region0: #{tpu_custom_call.1}
  #allocation0 [shape = 'u32[]', space=smem, size = 0x4, offset = 0x4, fixed_abs, tag = 'smem constant byte address 0x4 - core index']
  #allocation1 [shape = 'u32[144,128]{1,0:T(1,128)}', space=vmem, size = 0x12000, scoped, tag = 'internal scratch']
  %s0 = inlined_call_operand.hbm [shape: f32[16,128], index: 0, kind: input, shape index: {}]
  %s1 = inlined_call_operand.hbm [shape: f32[16,128], index: 1, kind: input, shape index: {}]
  %s2 = inlined_call_operand.hbm [shape: f32[8,128], index: 2, kind: output, shape index: {}]
  %s3 = sld [smem:[#allocation0]]
  $region30: #{tpu_custom_call.1} parent=0
    _
  %s5 = ssub.s32 1, %s3
  %s6 = scalar_select 0, %s5, %s3
  $region1: #{tpu_custom_call.1} parent=0
    #allocation2 [shape = 'u8[8192]{0}', space=vmem, size = 0x2000, scoped, tag = 'input window, operand 0, single buffered']
    #allocation3 [shape = 's32[1]{0}', space=sflag, size = 0x4, scoped, tag = 'scoped memory for tpu_custom_call.1']
    #allocation4 [shape = 's32[1]{0}', space=sflag, size = 0x4, scoped, tag = 'scoped memory for tpu_custom_call.1']
    #allocation5 [shape = 'u8[8192]{0}', space=vmem, size = 0x2000, scoped, tag = 'input window, operand 1, single buffered']
    #allocation6 [shape = 's32[1]{0}', space=sflag, size = 0x4, scoped, tag = 'scoped memory for tpu_custom_call.1']
    #allocation7 [shape = 'u8[4096]{0}', space=vmem, size = 0x1000, scoped, tag = 'output window, operand 0, single buffered']
    %7 = vsyncpa [#allocation3], 0
    %8 = vsyncpa [#allocation6], 0
    %9 = vsyncpa [#allocation4], 0
    // Predicated region
    $region2: #{tpu_custom_call.1} parent=1 // pred_check
      _
    $region3: #{tpu_custom_call.1} parent=1 // pred_check_branch
      %11 = sbr.rel (0) target = $region5
    $region4: #{tpu_custom_call.1} parent=1 // pred_region
      %s12 = sadd.s32 0, 0
      %p13 = scmp.lt.s32.totalorder %s12, 0
      %s14 = scalar_select %p13, %s12, 0
      %s15 = smul.u32 2, %s14
      %s17 = ssub.s32 256, 256
      %18 = vsyncadd [#allocation3], %s17
      %s19 = smul.addr %s15, 128
      %s20 = scalar_lea.hbm %s0, %s19
      %s21 = sshll.u32 [#allocation2], 4
      %s22 = int_to_ptr.vmem [resolvable:$true] %s21
      %27 = dma.hbm_to_vmem [thread:$0]  %s20, 256, %s22, [#allocation3], 128, 128, 8
    $region5: #{tpu_custom_call.1} parent=1 // pred_fallthru
      _
    // Predicated region
    $region6: #{tpu_custom_call.1} parent=1 // pred_check
      _
    $region7: #{tpu_custom_call.1} parent=1 // pred_check_branch
      %29 = sbr.rel (0) target = $region9
    $region8: #{tpu_custom_call.1} parent=1 // pred_region
      %s30 = sadd.s32 0, 0
      %p31 = scmp.lt.s32.totalorder %s30, 0
      %s32 = scalar_select %p31, %s30, 0
      %s33 = smul.u32 2, %s32
      %s35 = ssub.s32 256, 256
      %36 = vsyncadd [#allocation6], %s35
      %s37 = smul.addr %s33, 128
      %s38 = scalar_lea.hbm %s1, %s37
      %s39 = sshll.u32 [#allocation5], 4
      %s40 = int_to_ptr.vmem [resolvable:$true] %s39
      %45 = dma.hbm_to_vmem [thread:$0]  %s38, 256, %s40, [#allocation6], 128, 128, 8
    $region9: #{tpu_custom_call.1} parent=1 // pred_fallthru
      _
    // Predicated region
    $region10: #{tpu_custom_call.1} parent=1 // pred_check
      _
    $region11: #{tpu_custom_call.1} parent=1 // pred_check_branch
      %47 = sbr.rel (0) target = $region13
    $region12: #{tpu_custom_call.1} parent=1 // pred_region
      %48 = dma.done [#allocation3], 256
    $region13: #{tpu_custom_call.1} parent=1 // pred_fallthru
      _
    // Predicated region
    $region14: #{tpu_custom_call.1} parent=1 // pred_check
      _
    $region15: #{tpu_custom_call.1} parent=1 // pred_check_branch
      %50 = sbr.rel (0) target = $region17
    $region16: #{tpu_custom_call.1} parent=1 // pred_region
      %51 = dma.done [#allocation6], 256
    $region17: #{tpu_custom_call.1} parent=1 // pred_fallthru
      _
    %s52 = sadd.s32 0, 0
    %p53 = scmp.lt.s32.totalorder %s52, 0
    %s54 = scalar_select %p53, %s52, 0
    %s55 = smul.u32 2, %s54
    %s56 = sadd.s32 0, 0
    %p57 = scmp.lt.s32.totalorder %s56, 0
    %s58 = scalar_select %p57, %s56, 0
    %s59 = smul.u32 2, %s58
    %p60 = scmp.eq.s32.totalorder 0, 0
    // Predicated region
    $region18: #{tpu_custom_call.1} parent=1 // pred_check
      %p61 = pneg %p60
    $region19: #{tpu_custom_call.1} parent=1 // pred_check_branch
      %63 = sbr.rel (%p61) target = $region21
    $region20: #{tpu_custom_call.1} parent=1 // pred_region
      %64 = vst [vmem:[#allocation7] sm:$0xff] 0.0
    $region21: #{tpu_custom_call.1} parent=1 // pred_fallthru
      _
    %v65 = vld [vmem:[#allocation2] sm:$0xff]
    %v66 = vld [vmem:[#allocation2 + $0x8] sm:$0xff]
    %v67 = vld [vmem:[#allocation5] sm:$0xff]
    %v68 = vld [vmem:[#allocation5 + $0x8] sm:$0xff]
    %v69 = vand.u32 2147483647, %v65
    %v70 = vand.u32 2147483647, %v66
    %v71 = vsub.f32 0.0, %v69
    %v72 = vsub.f32 0.0, %v70
    %v73 = vmul.f32 %v71, 1.442695
    %v74 = vpow.pop %v73
    %v75 = vmul.f32 %v72, 1.442695
    %v76 = vpow.pop %v75
    %v77 = vmax.f32 %v65, 0.0
    %v78 = vmax.f32 %v66, 0.0
    %v79 = vmul.f32 %v65, %v67
    %v80 = vmul.f32 %v66, %v68
    %v81 = vsub.f32 %v77, %v79
    %v82 = vsub.f32 %v78, %v80
    %v83 = vadd.f32 %v74, 1.0
    %v84 = vlog2.pop %v83
    %v85 = vmul.f32 %v84, 0.6931472
    %v86 = vmul.f32 -0.5, %v74
    %v87 = vadd.f32 %v86, 1.0
    %v88 = vmul.f32 %v87, %v74
    %v89 = vand.u32 2147483647, %v74
    %vm90 = vcmp.lt.f32.partialorder %v89, 0.0004427343
    %v91 = vsel %vm90, %v88, %v85
    %v92 = vadd.f32 %v76, 1.0
    %v93 = vlog2.pop %v92
    %v94 = vmul.f32 %v93, 0.6931472
    %v95 = vmul.f32 -0.5, %v76
    %v96 = vadd.f32 %v95, 1.0
    %v97 = vmul.f32 %v96, %v76
    %v98 = vand.u32 2147483647, %v76
    %vm99 = vcmp.lt.f32.partialorder %v98, 0.0004427343
    %v100 = vsel %vm99, %v97, %v94
    %v101 = vadd.f32 %v81, %v91
    %v102 = vadd.f32 %v82, %v100
    %v103 = vadd.f32 %v74, 1.0
    %v104 = vadd.f32 %v76, 1.0
    %v105 = vrcp.pop %v103
    %v106 = vrcp.pop %v104
    %vm107 = vcmp.ge.f32.partialorder %v65, 0.0
    %vm108 = vcmp.ge.f32.partialorder %v66, 0.0
    %v109 = vsel %vm107, 1.0, %v74
    %v110 = vsel %vm108, 1.0, %v76
    %v111 = vmul.f32 %v109, %v105
    %v112 = vmul.f32 %v110, %v106
    %v113 = vmul.f32 %v67, %v111
    %v114 = vmul.f32 %v68, %v112
    %v115 = vsub.f32 1.0, %v67
    %v116 = vsub.f32 1.0, %v68
    %v117 = vsub.f32 1.0, %v111
    %v118 = vsub.f32 1.0, %v112
    %v119 = vmul.f32 %v115, %v117
    %v120 = vmul.f32 %v116, %v118
    %v121 = vadd.f32 %v113, %v119
    %v122 = vadd.f32 %v114, %v120
    %v123 = vmul.f32 %v67, 0.25
    %v124 = vmul.f32 %v68, 0.25
    %v125 = vmul.f32 %v115, 0.75
    %v126 = vmul.f32 %v116, 0.75
    %v127 = vadd.f32 %v123, %v125
    %v128 = vadd.f32 %v124, %v126
    %v129 = vsub.f32 1.0, %v121
    %v130 = vsub.f32 1.0, %v122
    %v131 = vmul.f32 %v129, %v129
    %v132 = vmul.f32 %v130, %v130
    %v133 = vmul.f32 %v101, %v127
    %v134 = vmul.f32 %v102, %v128
    %v135 = vmul.f32 %v133, %v131
    %v136 = vmul.f32 %v134, %v132
    %v137 = vld [vmem:[#allocation7] sm:$0xff]
    %v138 = vadd.f32 %v135, %v136
    %v139 = vadd.f32 %v137, %v138
    %140 = vst [vmem:[#allocation7] sm:$0xff] %v139
    // Predicated region
    $region22: #{tpu_custom_call.1} parent=1 // pred_check
      _
    $region23: #{tpu_custom_call.1} parent=1 // pred_check_branch
      %142 = sbr.rel (0) target = $region25
    $region24: #{tpu_custom_call.1} parent=1 // pred_region
      %s144 = ssub.s32 128, 128
      %145 = vsyncadd [#allocation4], %s144
      %s147 = sshll.u32 [#allocation7], 4
      %s148 = int_to_ptr.vmem [resolvable:$true] %s147
      %150 = dma.vmem_to_hbm [thread:$0]  %s148, 128, %s2, [#allocation4]
    $region25: #{tpu_custom_call.1} parent=1 // pred_fallthru
      _
    // Predicated region
    $region26: #{tpu_custom_call.1} parent=1 // pred_check
      _
    $region27: #{tpu_custom_call.1} parent=1 // pred_check_branch
      %152 = sbr.rel (0) target = $region29
    $region28: #{tpu_custom_call.1} parent=1 // pred_region
      %153 = dma.done [#allocation4], 128
    $region29: #{tpu_custom_call.1} parent=1 // pred_fallthru
      _
    %154 = vsyncpa [#allocation3], 1
    %155 = vsyncpa [#allocation6], 1
    %156 = vsyncpa [#allocation4], 1

</llo_original>
